<compile_context>
chip_gen: v6e
topology: v6e:2x2x1
jax: 0.10.0
libtpu: 0.0.40
codegen_flags: <defaults>
</compile_context>

<pallas_src>
import functools

import jax
import jax.numpy as jnp
from jax.experimental import pallas as pl
from jax.experimental.pallas import tpu as pltpu


_VMEM_TILE_BUDGET = 24 * 1024 * 1024   # double-buffered resident bytes per grid step
_VMEM_LIMIT_BYTES = 48 * 1024 * 1024   # scoped VMEM limit (safe on v5e/v6e/v7x)


def _ptmodule_kernel(x_ref, add_ref, sub_ref, mul_ref, div_ref, cmp_ref):
    # x_ref: (5, TR, C) block holding input slices 0..4 of the current row tile.
    x0 = x_ref[0]
    x1 = x_ref[1]
    x2 = x_ref[2]
    x3 = x_ref[3]
    x4 = x_ref[4]

    add_ref[...] = x0 + x1
    sub_ref[...] = x1 - x2
    mul_ref[...] = x2 * x3
    # 1e-5 is weakly typed -> stays in the input dtype (matches torch semantics).
    div_ref[...] = (x3 / (x4 + 1e-5)).astype(div_ref.dtype)
    cmp_ref[...] = (x0 > x4).astype(cmp_ref.dtype)


@functools.cache
def _bool_outputs_supported():
    """One-time probe: can this Pallas/Mosaic build store bool kernel outputs?"""
    def probe(x_ref, o_ref):
        o_ref[...] = x_ref[...] > 0.0

    try:
        out = pl.pallas_call(
            probe, out_shape=jax.ShapeDtypeStruct((8, 128), jnp.bool_)
        )(jnp.zeros((8, 128), jnp.float32))
        jax.block_until_ready(out)
        return True
    except Exception:  # lowering/compile failure -> use uint8 fallback path
        return False


def _choose_row_tile(r, c, dtype):
    """Largest row tile keeping the double-buffered working set within budget."""
    item = jnp.dtype(dtype).itemsize
    # Per tile row, x2 for double buffering: 5 input slices + 4 outputs + 1B mask.
    bytes_per_row = 2 * c * (9 * item + 1)
    max_rows = max(32, _VMEM_TILE_BUDGET // bytes_per_row)
    if r <= max_rows:
        return r  # single block over all rows (full-dim block is always legal)
    # Aim for ~2 MiB per output tile; multiple of 32 for uint8/bool sublane packing.
    target = max(32, (2 * 1024 * 1024) // (c * item))
    tr = min(target, max_rows, r)
    return max(32, (tr // 32) * 32)


def ptmodule_forward(x, *, row_block=None):
    """x: [S, R, C] with S >= 5. Returns (add, sub, mul, div, cmp_bool)."""
    assert x.ndim >= 2 and x.shape[0] >= 5, "expect x of shape [S>=5, ...]"
    orig_trailing = x.shape[1:]
    if x.ndim == 2:
        x = x[:, None, :]
    elif x.ndim > 3:
        # Collapse middle dims; elementwise op is layout-agnostic and the
        # reshape is a no-copy view for contiguous arrays.
        x = x.reshape(x.shape[0], -1, x.shape[-1])
    _, r, c = x.shape

    if row_block is not None:
        tr = min(r, row_block)
        if tr < r:
            tr = max(8, (tr // 8) * 8)  # satisfy (8, 128) tiling on the sublane axis
    else:
        tr = _choose_row_tile(r, c, x.dtype)

    mask_dtype = jnp.bool_ if _bool_outputs_supported() else jnp.uint8

    grid = (pl.cdiv(r, tr),)
    x_spec = pl.BlockSpec((5, tr, c), lambda i: (0, i, 0))   # slices 0..4, row tile i
    o_spec = pl.BlockSpec((tr, c), lambda i: (i, 0))

    out_shapes = (
        jax.ShapeDtypeStruct((r, c), x.dtype),     # add
        jax.ShapeDtypeStruct((r, c), x.dtype),     # sub
        jax.ShapeDtypeStruct((r, c), x.dtype),     # mul
        jax.ShapeDtypeStruct((r, c), x.dtype),     # div
        jax.ShapeDtypeStruct((r, c), mask_dtype),  # cmp
    )

    add_r, sub_r, mul_r, div_r, cmp_r = pl.pallas_call(
        _ptmodule_kernel,
        out_shape=out_shapes,
        grid=grid,
        in_specs=[x_spec],
        out_specs=(o_spec, o_spec, o_spec, o_spec, o_spec),
        compiler_params=pltpu.CompilerParams(
            dimension_semantics=("parallel",),
            vmem_limit_bytes=_VMEM_LIMIT_BYTES,
        ),
    )(x)

    if mask_dtype == jnp.uint8:
        # Fallback only: extra elementwise pass when bool outputs are unsupported.
        cmp_r = cmp_r.astype(jnp.bool_)

    outs = (add_r, sub_r, mul_r, div_r, cmp_r)
    return tuple(o.reshape(orig_trailing) for o in outs)


if __name__ == "__main__":
    key = jax.random.PRNGKey(0)
    # 5 slices along dim 0, rows=128, cols=256 -- small but tile-aligned.
    x = jax.random.normal(key, (5, 128, 256), dtype=jnp.float32)

    ref = (
        x[0] + x[1],
        x[1] - x[2],
        x[2] * x[3],
        x[3] / (x[4] + 1e-5),
        x[0] > x[4],
    )

    # row_block=64 exercises the pipelined multi-block grid path in one run.
    outs = jax.block_until_ready(ptmodule_forward(x, row_block=64))
    for got, want in zip(outs, ref):
        assert got.shape == want.shape, (got.shape, want.shape)
        assert got.dtype == want.dtype, (got.dtype, want.dtype)
        if want.dtype == jnp.bool_:
            assert bool(jnp.all(got == want))
        else:
            assert bool(jnp.allclose(got, want, rtol=1e-6, atol=1e-6))

    print("KERNEL_OK")
</pallas_src>

<mosaic_0001>
module attributes {stable_mosaic.version = 11 : i64} {
  func.func @probe(%arg0: memref<8x128xf32, #tpu.memory_space<vmem>>, %arg1: memref<8x128xi32, #tpu.memory_space<vmem>>) attributes {dimension_semantics = [], scalar_prefetch = 0 : i64, scratch_operands = 0 : i64, tpu.core_type = #tpu.core_type<tc>} {
    %c0 = arith.constant 0 : index
    %c0_0 = arith.constant 0 : index
    %0 = vector.load %arg0[%c0, %c0_0] : memref<8x128xf32, #tpu.memory_space<vmem>>, vector<8x128xf32>
    %cst = arith.constant 0.000000e+00 : f32
    %1 = vector.broadcast %cst : f32 to vector<8x128xf32>
    %2 = arith.cmpf ogt, %0, %1 : vector<8x128xf32>
    %c0_1 = arith.constant 0 : index
    %c0_2 = arith.constant 0 : index
    %3 = vector.load %arg1[%c0_1, %c0_2] : memref<8x128xi32, #tpu.memory_space<vmem>>, vector<8x128xi32>
    %4 = arith.extui %2 : vector<8x128xi1> to vector<8x128xi32>
    %cst_3 = arith.constant dense<0> : vector<8x128xi32>
    %5 = arith.cmpi ne, %3, %cst_3 : vector<8x128xi32>
    tpu.vector_store %arg1[%c0_1, %c0_2], %4 {strides = array<i32>} : memref<8x128xi32, #tpu.memory_space<vmem>>, vector<8x128xi32>,
    return
  }
}

module attributes {stable_mosaic.version = 11 : i64} {
  func.func @_ptmodule_kernel(%arg0: i32, %arg1: memref<5x64x256xf32, #tpu.memory_space<vmem>>, %arg2: memref<64x256xf32, #tpu.memory_space<vmem>>, %arg3: memref<64x256xf32, #tpu.memory_space<vmem>>, %arg4: memref<64x256xf32, #tpu.memory_space<vmem>>, %arg5: memref<64x256xf32, #tpu.memory_space<vmem>>, %arg6: memref<64x256xi8, #tpu.memory_space<vmem>>) attributes {dimension_semantics = [#tpu.dimension_semantics<parallel>], iteration_bounds = array<i64: 2>, scalar_prefetch = 0 : i64, scratch_operands = 0 : i64, tpu.core_type = #tpu.core_type<tc>, window_params = [{transform_indices = @transform_0, window_bounds = array<i64: 5, 64, 256>}, {transform_indices = @transform_1, window_bounds = array<i64: 64, 256>}, {transform_indices = @transform_2, window_bounds = array<i64: 64, 256>}, {transform_indices = @transform_3, window_bounds = array<i64: 64, 256>}, {transform_indices = @transform_4, window_bounds = array<i64: 64, 256>}, {transform_indices = @transform_5, window_bounds = array<i64: 64, 256>}]} {
    %c0 = arith.constant 0 : index
    %c0_0 = arith.constant 0 : index
    %c0_1 = arith.constant 0 : index
    %0 = vector.load %arg1[%c0, %c0_0, %c0_1] : memref<5x64x256xf32, #tpu.memory_space<vmem>>, vector<1x64x256xf32>
    %1 = vector.shape_cast %0 : vector<1x64x256xf32> to vector<64x256xf32>
    %c1 = arith.constant 1 : index
    %c0_2 = arith.constant 0 : index
    %c0_3 = arith.constant 0 : index
    %2 = vector.load %arg1[%c1, %c0_2, %c0_3] : memref<5x64x256xf32, #tpu.memory_space<vmem>>, vector<1x64x256xf32>
    %3 = vector.shape_cast %2 : vector<1x64x256xf32> to vector<64x256xf32>
    %c2 = arith.constant 2 : index
    %c0_4 = arith.constant 0 : index
    %c0_5 = arith.constant 0 : index
    %4 = vector.load %arg1[%c2, %c0_4, %c0_5] : memref<5x64x256xf32, #tpu.memory_space<vmem>>, vector<1x64x256xf32>
    %5 = vector.shape_cast %4 : vector<1x64x256xf32> to vector<64x256xf32>
    %c3 = arith.constant 3 : index
    %c0_6 = arith.constant 0 : index
    %c0_7 = arith.constant 0 : index
    %6 = vector.load %arg1[%c3, %c0_6, %c0_7] : memref<5x64x256xf32, #tpu.memory_space<vmem>>, vector<1x64x256xf32>
    %7 = vector.shape_cast %6 : vector<1x64x256xf32> to vector<64x256xf32>
    %c4 = arith.constant 4 : index
    %c0_8 = arith.constant 0 : index
    %c0_9 = arith.constant 0 : index
    %8 = vector.load %arg1[%c4, %c0_8, %c0_9] : memref<5x64x256xf32, #tpu.memory_space<vmem>>, vector<1x64x256xf32>
    %9 = vector.shape_cast %8 : vector<1x64x256xf32> to vector<64x256xf32>
    %10 = arith.addf %1, %3 : vector<64x256xf32>
    %c0_10 = arith.constant 0 : index
    %c0_11 = arith.constant 0 : index
    %11 = vector.load %arg2[%c0_10, %c0_11] : memref<64x256xf32, #tpu.memory_space<vmem>>, vector<64x256xf32>
    tpu.vector_store %arg2[%c0_10, %c0_11], %10 {strides = array<i32>} : memref<64x256xf32, #tpu.memory_space<vmem>>, vector<64x256xf32>,
    %12 = arith.subf %3, %5 : vector<64x256xf32>
    %c0_12 = arith.constant 0 : index
    %c0_13 = arith.constant 0 : index
    %13 = vector.load %arg3[%c0_12, %c0_13] : memref<64x256xf32, #tpu.memory_space<vmem>>, vector<64x256xf32>
    tpu.vector_store %arg3[%c0_12, %c0_13], %12 {strides = array<i32>} : memref<64x256xf32, #tpu.memory_space<vmem>>, vector<64x256xf32>,
    %14 = arith.mulf %5, %7 : vector<64x256xf32>
    %c0_14 = arith.constant 0 : index
    %c0_15 = arith.constant 0 : index
    %15 = vector.load %arg4[%c0_14, %c0_15] : memref<64x256xf32, #tpu.memory_space<vmem>>, vector<64x256xf32>
    tpu.vector_store %arg4[%c0_14, %c0_15], %14 {strides = array<i32>} : memref<64x256xf32, #tpu.memory_space<vmem>>, vector<64x256xf32>,
    %cst = arith.constant 9.99999974E-6 : f32
    %16 = vector.broadcast %cst : f32 to vector<64x256xf32>
    %17 = arith.addf %9, %16 : vector<64x256xf32>
    %18 = arith.divf %7, %17 : vector<64x256xf32>
    %c0_16 = arith.constant 0 : index
    %c0_17 = arith.constant 0 : index
    %19 = vector.load %arg5[%c0_16, %c0_17] : memref<64x256xf32, #tpu.memory_space<vmem>>, vector<64x256xf32>
    tpu.vector_store %arg5[%c0_16, %c0_17], %18 {strides = array<i32>} : memref<64x256xf32, #tpu.memory_space<vmem>>, vector<64x256xf32>,
    %20 = arith.cmpf ogt, %1, %9 : vector<64x256xf32>
    %21 = arith.extui %20 : vector<64x256xi1> to vector<64x256xi8>
    %c0_18 = arith.constant 0 : index
    %c0_19 = arith.constant 0 : index
    %22 = vector.load %arg6[%c0_18, %c0_19] : memref<64x256xi8, #tpu.memory_space<vmem>>, vector<64x256xi8>
    tpu.vector_store %arg6[%c0_18, %c0_19], %21 {strides = array<i32>} : memref<64x256xi8, #tpu.memory_space<vmem>>, vector<64x256xi8>,
    return
  }
  func.func @transform_0(%arg0: i32) -> (i32, i32, i32) {
    %c0_i32 = arith.constant 0 : i32
    %c0_i32_0 = arith.constant 0 : i32
    %c0_i32_1 = arith.constant 0 : i32
    return %c0_i32, %arg0, %c0_i32_0 : i32, i32, i32
  }
  func.func @transform_1(%arg0: i32) -> (i32, i32) {
    %c0_i32 = arith.constant 0 : i32
    %c0_i32_0 = arith.constant 0 : i32
    return %arg0, %c0_i32 : i32, i32
  }
  func.func @transform_2(%arg0: i32) -> (i32, i32) {
    %c0_i32 = arith.constant 0 : i32
    %c0_i32_0 = arith.constant 0 : i32
    return %arg0, %c0_i32 : i32, i32
  }
  func.func @transform_3(%arg0: i32) -> (i32, i32) {
    %c0_i32 = arith.constant 0 : i32
    %c0_i32_0 = arith.constant 0 : i32
    return %arg0, %c0_i32 : i32, i32
  }
  func.func @transform_4(%arg0: i32) -> (i32, i32) {
    %c0_i32 = arith.constant 0 : i32
    %c0_i32_0 = arith.constant 0 : i32
    return %arg0, %c0_i32 : i32, i32
  }
  func.func @transform_5(%arg0: i32) -> (i32, i32) {
    %c0_i32 = arith.constant 0 : i32
    %c0_i32_0 = arith.constant 0 : i32
    return %arg0, %c0_i32 : i32, i32
  }
}

</mosaic_0001>

<llo_original>
// kernel: tpu_custom_call.1
$region0: #{tpu_custom_call.1}
  #allocation0 [shape = 'u32[]', space=smem, size = 0x4, offset = 0x4, fixed_abs, tag = 'smem constant byte address 0x4 - core index']
  #allocation1 [shape = 'u32[144,128]{1,0:T(1,128)}', space=vmem, size = 0x12000, scoped, tag = 'internal scratch']
  %s0 = inlined_call_operand.hbm [shape: f32[8,128], index: 0, kind: input, shape index: {}]
  %s1 = inlined_call_operand.vmem [shape: s32[8,128], index: 1, kind: output, shape index: {}]
  %s2 = sld [smem:[#allocation0]]
  $region18: #{tpu_custom_call.1} parent=0
    _
  %s4 = ssub.s32 1, %s2
  %s5 = scalar_select 0, %s4, %s2
  $region1: #{tpu_custom_call.1} parent=0
    #allocation2 [shape = 'u8[4096]{0}', space=vmem, size = 0x1000, scoped, tag = 'input window, operand 0, single buffered']
    #allocation3 [shape = 's32[1]{0}', space=sflag, size = 0x4, scoped, tag = 'scoped memory for tpu_custom_call.1']
    %6 = vsyncpa [#allocation3], 0
    // Predicated region
    $region2: #{tpu_custom_call.1} parent=1 // pred_check
      _
    $region3: #{tpu_custom_call.1} parent=1 // pred_check_branch
      %8 = sbr.rel (0) target = $region5
    $region4: #{tpu_custom_call.1} parent=1 // pred_region
      %s10 = ssub.s32 128, 128
      %11 = vsyncadd [#allocation3], %s10
      %s13 = sshll.u32 [#allocation2], 4
      %s14 = int_to_ptr.vmem [resolvable:$true] %s13
      %16 = dma.hbm_to_vmem [thread:$0]  %s0, 128, %s14, [#allocation3]
    $region5: #{tpu_custom_call.1} parent=1 // pred_fallthru
      _
    // Predicated region
    $region6: #{tpu_custom_call.1} parent=1 // pred_check
      _
    $region7: #{tpu_custom_call.1} parent=1 // pred_check_branch
      %18 = sbr.rel (0) target = $region9
    $region8: #{tpu_custom_call.1} parent=1 // pred_region
      %19 = dma.done [#allocation3], 128
    $region9: #{tpu_custom_call.1} parent=1 // pred_fallthru
      _
    %v20 = vld [vmem:[#allocation2] sm:$0xff]
    %vm21 = vcmp.gt.f32.partialorder %v20, 0.0
    %v22 = vsel %vm21, 1, 0
    %23 = vst [vmem:[%s1] sm:$0xff] %v22
    // Predicated region
    $region10: #{tpu_custom_call.1} parent=1 // pred_check
      _
    $region11: #{tpu_custom_call.1} parent=1 // pred_check_branch
      %25 = sbr.rel (0) target = $region13
    $region12: #{tpu_custom_call.1} parent=1 // pred_region
      _
    $region13: #{tpu_custom_call.1} parent=1 // pred_fallthru
      _
    // Predicated region
    $region14: #{tpu_custom_call.1} parent=1 // pred_check
      _
    $region15: #{tpu_custom_call.1} parent=1 // pred_check_branch
      %27 = sbr.rel (0) target = $region17
    $region16: #{tpu_custom_call.1} parent=1 // pred_region
      _
    $region17: #{tpu_custom_call.1} parent=1 // pred_fallthru
      _
    %28 = vsyncpa [#allocation3], 1

// kernel: tpu_custom_call.1
$region0: #{tpu_custom_call.1}
  #allocation0 [shape = 'u32[]', space=smem, size = 0x4, offset = 0x4, fixed_abs, tag = 'smem constant byte address 0x4 - core index']
  #allocation1 [shape = 'u32[144,128]{1,0:T(1,128)}', space=vmem, size = 0x12000, scoped, tag = 'internal scratch']
  #allocation12 [shape = 's32[]', space=sflag, size = 0x4, offset = 0, fixed_abs, tag = 'sflag constant byte address 0x0 - dummy sync flag']
  %s0 = inlined_call_operand.hbm [shape: f32[5,128,256], index: 0, kind: input, shape index: {}]
  %s1 = inlined_call_operand.hbm [shape: f32[128,256], index: 1, kind: output, shape index: {0}]
  %s2 = inlined_call_operand.hbm [shape: f32[128,256], index: 2, kind: output, shape index: {1}]
  %s3 = inlined_call_operand.hbm [shape: f32[128,256], index: 3, kind: output, shape index: {2}]
  %s4 = inlined_call_operand.hbm [shape: f32[128,256], index: 4, kind: output, shape index: {3}]
  %s5 = inlined_call_operand.hbm [shape: u8[128,256], index: 5, kind: output, shape index: {4}]
  %6 = xla_tuple %s1, %s2, %s3, %s4, %s5
  %s7 = sld [smem:[#allocation0]]
  $region73: #{tpu_custom_call.1} parent=0
    _
  %s9 = ssub.s32 1, %s7
  %s10 = scalar_select 0, %s9, %s7
  $region1: #{tpu_custom_call.1} parent=0
    #allocation2 [shape = 'u8[655360]{0}', space=vmem, size = 0xa0000, scoped, tag = 'input window, operand 0']
    #allocation3 [shape = 's32[2]{0}', space=sflag, size = 0x8, scoped, tag = 'scoped memory for tpu_custom_call.1']
    #allocation4 [shape = 's32[2]{0}', space=sflag, size = 0x8, scoped, tag = 'scoped memory for tpu_custom_call.1']
    #allocation5 [shape = 'u8[131072]{0}', space=vmem, size = 0x20000, scoped, tag = 'output window, operand 0']
    #allocation6 [shape = 'u8[131072]{0}', space=vmem, size = 0x20000, scoped, tag = 'output window, operand 1']
    #allocation7 [shape = 's32[2]{0}', space=sflag, size = 0x8, scoped, tag = 'scoped memory for tpu_custom_call.1']
    #allocation8 [shape = 'u8[131072]{0}', space=vmem, size = 0x20000, scoped, tag = 'output window, operand 2']
    #allocation9 [shape = 'u8[131072]{0}', space=vmem, size = 0x20000, scoped, tag = 'output window, operand 3']
    #allocation10 [shape = 's32[2]{0}', space=sflag, size = 0x8, scoped, tag = 'scoped memory for tpu_custom_call.1']
    #allocation11 [shape = 'u8[32768]{0}', space=vmem, size = 0x8000, scoped, tag = 'output window, operand 4']
    %11 = vsyncpa [#allocation3], 0
    %s12 = scalar_lea.sflag [#allocation3], 1
    %13 = vsyncpa %s12, 0
    %14 = vsyncpa [#allocation4], 0
    %s15 = scalar_lea.sflag [#allocation4], 1
    %16 = vsyncpa %s15, 0
    %17 = vsyncpa [#allocation7], 0
    %s18 = scalar_lea.sflag [#allocation7], 1
    %19 = vsyncpa %s18, 0
    %20 = vsyncpa [#allocation10], 0
    %s21 = scalar_lea.sflag [#allocation10], 1
    %22 = vsyncpa %s21, 0
    loop: start=0, step=1, limit=4
    $region2: #{tpu_custom_call.1} parent=1 // loop_pre_header
      _
    $region3: #{tpu_custom_call.1} parent=1 // loop_header
      %s24 = sphi 0, %s28
      %p25 = scmp.ge.s32.totalorder %s24, 4
      %s34 = sphi 0, %s36
      %s37 = sphi 0, %s34
      %s38 = sphi 0, %s37
      %s54 = sphi 0, %s38
      %s60 = sphi 0, %s62
      %s63 = sphi 0, %s60
      %s64 = sphi 0, %s63
      %s80 = sphi 0, %s64
      %s86 = sphi 0, %s88
      %s89 = sphi 0, %s86
      %s90 = sphi 0, %s89
      %s106 = sphi 0, %s90
      %s112 = sphi 0, %s114
      %s115 = sphi 0, %s112
      %s116 = sphi 0, %s115
      %s132 = sphi 0, %s116
      %s138 = sphi 0, %s140
      %s141 = sphi 0, %s138
      %s142 = sphi 0, %s141
      %s158 = sphi 0, %s142
      %s164 = sphi 0, %s166
      %s167 = sphi 0, %s164
      %s168 = sphi 0, %s167
      %s184 = sphi 0, %s168
    $region4: #{tpu_custom_call.1} parent=1 // loop_header_branch
      %27 = sbr.rel (%p25) target = $region8
    $region5: #{tpu_custom_call.1} parent=1 // loop_body
      %s29 = ssub.s32 %s24, 1
      %s30 = ssub.s32 %s24, 2
      %s31 = sadd.s32 %s24, 1
      %s32 = ssub.s32 %s24, %s31
      %p33 = scmp.eq.s32.totalorder %s32, 0
      %s35 = sadd.s32 %s34, 1
      %s36 = scalar_select %p33, %s34, %s35
      %p39 = pneg %p33
      %p40 = scmp.eq.s32.totalorder %s24, 1
      %p41 = por %p39, %p40
      %p42 = scmp.ne.s32.totalorder %s34, %s37
      %p43 = scmp.eq.s32.totalorder %s24, 0
      %p44 = por %p42, %p43
      %p45 = scmp.ne.s32.totalorder %s34, %s37
      %p46 = scmp.eq.s32.totalorder %s29, 1
      %p47 = por %p45, %p46
      %p48 = scmp.ne.s32.totalorder %s37, %s38
      %p49 = scmp.eq.s32.totalorder %s29, 0
      %p50 = por %p48, %p49
      %p51 = scmp.ne.s32.totalorder %s37, %s38
      %p52 = scmp.eq.s32.totalorder %s30, 1
      %p53 = por %p51, %p52
      %p55 = scmp.ne.s32.totalorder %s38, %s54
      %p56 = scmp.eq.s32.totalorder %s30, 0
      %p57 = por %p55, %p56
      %s58 = ssub.s32 %s24, %s31
      %p59 = scmp.eq.s32.totalorder %s58, 0
      %s61 = sadd.s32 %s60, 1
      %s62 = scalar_select %p59, %s60, %s61
      %p65 = pneg %p59
      %p66 = scmp.eq.s32.totalorder %s24, 1
      %p67 = por %p65, %p66
      %p68 = scmp.ne.s32.totalorder %s60, %s63
      %p69 = scmp.eq.s32.totalorder %s24, 0
      %p70 = por %p68, %p69
      %p71 = scmp.ne.s32.totalorder %s60, %s63
      %p72 = scmp.eq.s32.totalorder %s29, 1
      %p73 = por %p71, %p72
      %p74 = scmp.ne.s32.totalorder %s63, %s64
      %p75 = scmp.eq.s32.totalorder %s29, 0
      %p76 = por %p74, %p75
      %p77 = scmp.ne.s32.totalorder %s63, %s64
      %p78 = scmp.eq.s32.totalorder %s30, 1
      %p79 = por %p77, %p78
      %p81 = scmp.ne.s32.totalorder %s64, %s80
      %p82 = scmp.eq.s32.totalorder %s30, 0
      %p83 = por %p81, %p82
      %s84 = ssub.s32 %s24, %s31
      %p85 = scmp.eq.s32.totalorder %s84, 0
      %s87 = sadd.s32 %s86, 1
      %s88 = scalar_select %p85, %s86, %s87
      %p91 = pneg %p85
      %p92 = scmp.eq.s32.totalorder %s24, 1
      %p93 = por %p91, %p92
      %p94 = scmp.ne.s32.totalorder %s86, %s89
      %p95 = scmp.eq.s32.totalorder %s24, 0
      %p96 = por %p94, %p95
      %p97 = scmp.ne.s32.totalorder %s86, %s89
      %p98 = scmp.eq.s32.totalorder %s29, 1
      %p99 = por %p97, %p98
      %p100 = scmp.ne.s32.totalorder %s89, %s90
      %p101 = scmp.eq.s32.totalorder %s29, 0
      %p102 = por %p100, %p101
      %p103 = scmp.ne.s32.totalorder %s89, %s90
      %p104 = scmp.eq.s32.totalorder %s30, 1
      %p105 = por %p103, %p104
      %p107 = scmp.ne.s32.totalorder %s90, %s106
      %p108 = scmp.eq.s32.totalorder %s30, 0
      %p109 = por %p107, %p108
      %s110 = ssub.s32 %s24, %s31
      %p111 = scmp.eq.s32.totalorder %s110, 0
      %s113 = sadd.s32 %s112, 1
      %s114 = scalar_select %p111, %s112, %s113
      %p117 = pneg %p111
      %p118 = scmp.eq.s32.totalorder %s24, 1
      %p119 = por %p117, %p118
      %p120 = scmp.ne.s32.totalorder %s112, %s115
      %p121 = scmp.eq.s32.totalorder %s24, 0
      %p122 = por %p120, %p121
      %p123 = scmp.ne.s32.totalorder %s112, %s115
      %p124 = scmp.eq.s32.totalorder %s29, 1
      %p125 = por %p123, %p124
      %p126 = scmp.ne.s32.totalorder %s115, %s116
      %p127 = scmp.eq.s32.totalorder %s29, 0
      %p128 = por %p126, %p127
      %p129 = scmp.ne.s32.totalorder %s115, %s116
      %p130 = scmp.eq.s32.totalorder %s30, 1
      %p131 = por %p129, %p130
      %p133 = scmp.ne.s32.totalorder %s116, %s132
      %p134 = scmp.eq.s32.totalorder %s30, 0
      %p135 = por %p133, %p134
      %s136 = ssub.s32 %s24, %s31
      %p137 = scmp.eq.s32.totalorder %s136, 0
      %s139 = sadd.s32 %s138, 1
      %s140 = scalar_select %p137, %s138, %s139
      %p143 = pneg %p137
      %p144 = scmp.eq.s32.totalorder %s24, 1
      %p145 = por %p143, %p144
      %p146 = scmp.ne.s32.totalorder %s138, %s141
      %p147 = scmp.eq.s32.totalorder %s24, 0
      %p148 = por %p146, %p147
      %p149 = scmp.ne.s32.totalorder %s138, %s141
      %p150 = scmp.eq.s32.totalorder %s29, 1
      %p151 = por %p149, %p150
      %p152 = scmp.ne.s32.totalorder %s141, %s142
      %p153 = scmp.eq.s32.totalorder %s29, 0
      %p154 = por %p152, %p153
      %p155 = scmp.ne.s32.totalorder %s141, %s142
      %p156 = scmp.eq.s32.totalorder %s30, 1
      %p157 = por %p155, %p156
      %p159 = scmp.ne.s32.totalorder %s142, %s158
      %p160 = scmp.eq.s32.totalorder %s30, 0
      %p161 = por %p159, %p160
      %s162 = ssub.s32 %s24, %s31
      %p163 = scmp.eq.s32.totalorder %s162, 0
      %s165 = sadd.s32 %s164, 1
      %s166 = scalar_select %p163, %s164, %s165
      %p169 = pneg %p163
      %p170 = scmp.eq.s32.totalorder %s24, 1
      %p171 = por %p169, %p170
      %p172 = scmp.ne.s32.totalorder %s164, %s167
      %p173 = scmp.eq.s32.totalorder %s24, 0
      %p174 = por %p172, %p173
      %p175 = scmp.ne.s32.totalorder %s164, %s167
      %p176 = scmp.eq.s32.totalorder %s29, 1
      %p177 = por %p175, %p176
      %p178 = scmp.ne.s32.totalorder %s167, %s168
      %p179 = scmp.eq.s32.totalorder %s29, 0
      %p180 = por %p178, %p179
      %p181 = scmp.ne.s32.totalorder %s167, %s168
      %p182 = scmp.eq.s32.totalorder %s30, 1
      %p183 = por %p181, %p182
      %p185 = scmp.ne.s32.totalorder %s168, %s184
      %p186 = scmp.eq.s32.totalorder %s30, 0
      %p187 = por %p185, %p186
      %p188 = scmp.le.s32.totalorder 1, %s24
      %p189 = scmp.lt.s32.totalorder %s24, 3
      %p190 = pnand %p188, %p189
      %p191 = pneg %p190
      // Predicated region
      $region9: #{tpu_custom_call.1} parent=5 // pred_check
        _
      $region10: #{tpu_custom_call.1} parent=5 // pred_check_branch
        %193 = sbr.rel (%p190) target = $region12
      $region11: #{tpu_custom_call.1} parent=5 // pred_region
        %s194 = ssub.s32 %s24, 1
      $region12: #{tpu_custom_call.1} parent=5 // pred_fallthru
        _
      %p195 = scmp.lt.s32.totalorder %s24, 2
      // Predicated region
      $region13: #{tpu_custom_call.1} parent=5 // pred_check
        %p196 = pneg %p195
      $region14: #{tpu_custom_call.1} parent=5 // pred_check_branch
        %198 = sbr.rel (%p196) target = $region16
      $region15: #{tpu_custom_call.1} parent=5 // pred_region
        // Predicated region
        $region17: #{tpu_custom_call.1} parent=15 // pred_check
          %p199 = pneg %p44
        $region18: #{tpu_custom_call.1} parent=15 // pred_check_branch
          %201 = sbr.rel (%p199) target = $region20
        $region19: #{tpu_custom_call.1} parent=15 // pred_region
          #allocation13 [shape = 'u32[6]{0}', space=smem, size = 0x18, scoped, tag = 'DMA stride descriptor']
          %s202 = sand.u32 %s34, 1
          %s203 = scalar_lea.sflag [#allocation3], %s202
          %s204 = sand.u32 %s34, 1
          %s205 = smul.addr %s204, 640
          %s206 = scalar_lea.vmem [#allocation2], %s205
          %s207 = smul.u32 8, %s24
          %s209 = ssub.s32 10240, 10240
          %210 = vsyncadd %s203, %s209
          %s211 = smul.addr %s207, 2
          %s212 = smul.addr %s211, 128
          %s213 = scalar_lea.hbm %s0, %s212
          %s215 = sshll.u32 1, 14
          %s216 = sxor.u32 4294967295, %s215
          %s218 = sld [smem:[#allocation0]]
          %s219 = sadd.s32 2, %s218
          %s221 = sshll.u32 7, 26
          %s222 = sxor.u32 4294967295, %s221
          %s223 = sand.u32 0, %s222
          %s224 = sshll.u32 %s219, 26
          %s225 = sor.u32 %s223, %s224
          %s226 = sshll.u32 %s206, 4
          %s227 = int_to_ptr.vmem [resolvable:$true] %s226
          %233 = sst [smem:[#allocation13]] 4096
          %s234 = scalar_lea.smem [#allocation13], 1
          %235 = sst [smem:[%s234]] 2048
          %s236 = scalar_lea.smem [#allocation13], 2
          %237 = sst [smem:[%s236]] 8
          %s238 = scalar_lea.smem [#allocation13], 3
          %239 = sst [smem:[%s238]] 256
          %s240 = scalar_lea.smem [#allocation13], 4
          %241 = sst [smem:[%s240]] 256
          %s242 = scalar_lea.smem [#allocation13], 5
          %243 = sst [smem:[%s242]] 16
          %245 = dma.general %s213, 10240, %s227, %s203, 131072, [#allocation13], %s225, 0
        $region20: #{tpu_custom_call.1} parent=15 // pred_fallthru
          _
      $region16: #{tpu_custom_call.1} parent=5 // pred_fallthru
        _
      %p246 = scmp.le.s32.totalorder 1, %s24
      %p247 = scmp.lt.s32.totalorder %s24, 3
      %p248 = pnand %p246, %p247
      %p249 = pneg %p248
      // Predicated region
      $region21: #{tpu_custom_call.1} parent=5 // pred_check
        _
      $region22: #{tpu_custom_call.1} parent=5 // pred_check_branch
        %251 = sbr.rel (%p248) target = $region24
      $region23: #{tpu_custom_call.1} parent=5 // pred_region
        %s252 = ssub.s32 %s24, 1
        %s253 = sand.u32 %s37, 1
        %s254 = scalar_lea.sflag [#allocation3], %s253
        %s255 = sand.u32 %s37, 1
        %s256 = smul.addr %s255, 640
        %s257 = scalar_lea.vmem [#allocation2], %s256
        // Predicated region
        $region25: #{tpu_custom_call.1} parent=23 // pred_check
          %p258 = pneg %p50
        $region26: #{tpu_custom_call.1} parent=23 // pred_check_branch
          %260 = sbr.rel (%p258) target = $region28
        $region27: #{tpu_custom_call.1} parent=23 // pred_region
          %261 = dma.done %s254, 10240
        $region28: #{tpu_custom_call.1} parent=23 // pred_fallthru
          _
        %s262 = sand.u32 %s37, 1
        %s263 = scalar_lea.sflag [#allocation3], %s262
        %s264 = sand.u32 %s37, 1
        %s265 = smul.addr %s264, 640
        %s266 = scalar_lea.vmem [#allocation2], %s265
        %p267 = pneg %p50
        %p268 = pneg %p47
        %p269 = pneg %p76
        %p270 = pneg %p73
        %s271 = sand.u32 %s63, 1
        %s272 = scalar_lea.sflag [#allocation4], %s271
        %s273 = sand.u32 %s63, 1
        %s274 = smul.addr %s273, 128
        %s275 = scalar_lea.vmem [#allocation5], %s274
        %p276 = pneg %p102
        %p277 = pneg %p99
        %s278 = sand.u32 %s29, 1
        %s279 = scalar_lea.sflag [#allocation7], %s278
        %s280 = sand.u32 %s89, 1
        %s281 = smul.addr %s280, 128
        %s282 = scalar_lea.vmem [#allocation6], %s281
        %p283 = pneg %p128
        %p284 = pneg %p125
        %s285 = sand.u32 %s29, 1
        %s286 = scalar_lea.sflag [#allocation7], %s285
        %s287 = sand.u32 %s115, 1
        %s288 = smul.addr %s287, 128
        %s289 = scalar_lea.vmem [#allocation8], %s288
        %p290 = pneg %p154
        %p291 = pneg %p151
        %s292 = sand.u32 %s29, 1
        %s293 = scalar_lea.sflag [#allocation10], %s292
        %s294 = sand.u32 %s141, 1
        %s295 = smul.addr %s294, 128
        %s296 = scalar_lea.vmem [#allocation9], %s295
        %p297 = pneg %p180
        %p298 = pneg %p177
        %s299 = sand.u32 %s29, 1
        %s300 = scalar_lea.sflag [#allocation10], %s299
        %s301 = sand.u32 %s167, 1
        %s302 = smul.addr %s301, 32
        %s303 = scalar_lea.vmem [#allocation11], %s302
        %s304 = smul.u32 8, %s29
        %s305 = smul.u32 8, %s29
        %s306 = smul.u32 8, %s29
        %s307 = smul.u32 8, %s29
        %s308 = smul.u32 8, %s29
        %s309 = smul.u32 2, %s29
        %v312 = vld [vmem:[%s257] sm:$0xff]
        %v313 = vld [vmem:[%s257 + $0x8] sm:$0xff]
        %v314 = vld [vmem:[%s257 + $0x10] sm:$0xff]
        %v315 = vld [vmem:[%s257 + $0x18] sm:$0xff]
        %v316 = vld [vmem:[%s257 + $0x20] sm:$0xff]
        %v317 = vld [vmem:[%s257 + $0x28] sm:$0xff]
        %v318 = vld [vmem:[%s257 + $0x30] sm:$0xff]
        %v319 = vld [vmem:[%s257 + $0x38] sm:$0xff]
        %v320 = vld [vmem:[%s257 + $0x40] sm:$0xff]
        %v321 = vld [vmem:[%s257 + $0x48] sm:$0xff]
        %v322 = vld [vmem:[%s257 + $0x50] sm:$0xff]
        %v323 = vld [vmem:[%s257 + $0x58] sm:$0xff]
        %v324 = vld [vmem:[%s257 + $0x60] sm:$0xff]
        %v325 = vld [vmem:[%s257 + $0x68] sm:$0xff]
        %v326 = vld [vmem:[%s257 + $0x70] sm:$0xff]
        %v327 = vld [vmem:[%s257 + $0x78] sm:$0xff]
        %s328 = scalar_lea.vmem %s257, 128 [#allocation2]
        %v329 = vld [vmem:[%s328] sm:$0xff]
        %v330 = vld [vmem:[%s328 + $0x8] sm:$0xff]
        %v331 = vld [vmem:[%s328 + $0x10] sm:$0xff]
        %v332 = vld [vmem:[%s328 + $0x18] sm:$0xff]
        %v333 = vld [vmem:[%s328 + $0x20] sm:$0xff]
        %v334 = vld [vmem:[%s328 + $0x28] sm:$0xff]
        %v335 = vld [vmem:[%s328 + $0x30] sm:$0xff]
        %v336 = vld [vmem:[%s328 + $0x38] sm:$0xff]
        %v337 = vld [vmem:[%s328 + $0x40] sm:$0xff]
        %v338 = vld [vmem:[%s328 + $0x48] sm:$0xff]
        %v339 = vld [vmem:[%s328 + $0x50] sm:$0xff]
        %v340 = vld [vmem:[%s328 + $0x58] sm:$0xff]
        %v341 = vld [vmem:[%s328 + $0x60] sm:$0xff]
        %v342 = vld [vmem:[%s328 + $0x68] sm:$0xff]
        %v343 = vld [vmem:[%s328 + $0x70] sm:$0xff]
        %v344 = vld [vmem:[%s328 + $0x78] sm:$0xff]
        %s345 = scalar_lea.vmem %s257, 256 [#allocation2]
        %v346 = vld [vmem:[%s345] sm:$0xff]
        %v347 = vld [vmem:[%s345 + $0x8] sm:$0xff]
        %v348 = vld [vmem:[%s345 + $0x10] sm:$0xff]
        %v349 = vld [vmem:[%s345 + $0x18] sm:$0xff]
        %v350 = vld [vmem:[%s345 + $0x20] sm:$0xff]
        %v351 = vld [vmem:[%s345 + $0x28] sm:$0xff]
        %v352 = vld [vmem:[%s345 + $0x30] sm:$0xff]
        %v353 = vld [vmem:[%s345 + $0x38] sm:$0xff]
        %v354 = vld [vmem:[%s345 + $0x40] sm:$0xff]
        %v355 = vld [vmem:[%s345 + $0x48] sm:$0xff]
        %v356 = vld [vmem:[%s345 + $0x50] sm:$0xff]
        %v357 = vld [vmem:[%s345 + $0x58] sm:$0xff]
        %v358 = vld [vmem:[%s345 + $0x60] sm:$0xff]
        %v359 = vld [vmem:[%s345 + $0x68] sm:$0xff]
        %v360 = vld [vmem:[%s345 + $0x70] sm:$0xff]
        %v361 = vld [vmem:[%s345 + $0x78] sm:$0xff]
        %s362 = scalar_lea.vmem %s257, 384 [#allocation2]
        %v363 = vld [vmem:[%s362] sm:$0xff]
        %v364 = vld [vmem:[%s362 + $0x8] sm:$0xff]
        %v365 = vld [vmem:[%s362 + $0x10] sm:$0xff]
        %v366 = vld [vmem:[%s362 + $0x18] sm:$0xff]
        %v367 = vld [vmem:[%s362 + $0x20] sm:$0xff]
        %v368 = vld [vmem:[%s362 + $0x28] sm:$0xff]
        %v369 = vld [vmem:[%s362 + $0x30] sm:$0xff]
        %v370 = vld [vmem:[%s362 + $0x38] sm:$0xff]
        %v371 = vld [vmem:[%s362 + $0x40] sm:$0xff]
        %v372 = vld [vmem:[%s362 + $0x48] sm:$0xff]
        %v373 = vld [vmem:[%s362 + $0x50] sm:$0xff]
        %v374 = vld [vmem:[%s362 + $0x58] sm:$0xff]
        %v375 = vld [vmem:[%s362 + $0x60] sm:$0xff]
        %v376 = vld [vmem:[%s362 + $0x68] sm:$0xff]
        %v377 = vld [vmem:[%s362 + $0x70] sm:$0xff]
        %v378 = vld [vmem:[%s362 + $0x78] sm:$0xff]
        %s379 = scalar_lea.vmem %s257, 512 [#allocation2]
        %v380 = vld [vmem:[%s379] sm:$0xff]
        %v381 = vld [vmem:[%s379 + $0x8] sm:$0xff]
        %v382 = vld [vmem:[%s379 + $0x10] sm:$0xff]
        %v383 = vld [vmem:[%s379 + $0x18] sm:$0xff]
        %v384 = vld [vmem:[%s379 + $0x20] sm:$0xff]
        %v385 = vld [vmem:[%s379 + $0x28] sm:$0xff]
        %v386 = vld [vmem:[%s379 + $0x30] sm:$0xff]
        %v387 = vld [vmem:[%s379 + $0x38] sm:$0xff]
        %v388 = vld [vmem:[%s379 + $0x40] sm:$0xff]
        %v389 = vld [vmem:[%s379 + $0x48] sm:$0xff]
        %v390 = vld [vmem:[%s379 + $0x50] sm:$0xff]
        %v391 = vld [vmem:[%s379 + $0x58] sm:$0xff]
        %v392 = vld [vmem:[%s379 + $0x60] sm:$0xff]
        %v393 = vld [vmem:[%s379 + $0x68] sm:$0xff]
        %v394 = vld [vmem:[%s379 + $0x70] sm:$0xff]
        %v395 = vld [vmem:[%s379 + $0x78] sm:$0xff]
        %v396 = vadd.f32 %v312, %v329
        %v397 = vadd.f32 %v313, %v330
        %v398 = vadd.f32 %v314, %v331
        %v399 = vadd.f32 %v315, %v332
        %v400 = vadd.f32 %v316, %v333
        %v401 = vadd.f32 %v317, %v334
        %v402 = vadd.f32 %v318, %v335
        %v403 = vadd.f32 %v319, %v336
        %v404 = vadd.f32 %v320, %v337
        %v405 = vadd.f32 %v321, %v338
        %v406 = vadd.f32 %v322, %v339
        %v407 = vadd.f32 %v323, %v340
        %v408 = vadd.f32 %v324, %v341
        %v409 = vadd.f32 %v325, %v342
        %v410 = vadd.f32 %v326, %v343
        %v411 = vadd.f32 %v327, %v344
        %412 = vst [vmem:[%s275] sm:$0xff] %v396
        %413 = vst [vmem:[%s275 + $0x8] sm:$0xff] %v397
        %414 = vst [vmem:[%s275 + $0x10] sm:$0xff] %v398
        %415 = vst [vmem:[%s275 + $0x18] sm:$0xff] %v399
        %416 = vst [vmem:[%s275 + $0x20] sm:$0xff] %v400
        %417 = vst [vmem:[%s275 + $0x28] sm:$0xff] %v401
        %418 = vst [vmem:[%s275 + $0x30] sm:$0xff] %v402
        %419 = vst [vmem:[%s275 + $0x38] sm:$0xff] %v403
        %420 = vst [vmem:[%s275 + $0x40] sm:$0xff] %v404
        %421 = vst [vmem:[%s275 + $0x48] sm:$0xff] %v405
        %422 = vst [vmem:[%s275 + $0x50] sm:$0xff] %v406
        %423 = vst [vmem:[%s275 + $0x58] sm:$0xff] %v407
        %424 = vst [vmem:[%s275 + $0x60] sm:$0xff] %v408
        %425 = vst [vmem:[%s275 + $0x68] sm:$0xff] %v409
        %426 = vst [vmem:[%s275 + $0x70] sm:$0xff] %v410
        %427 = vst [vmem:[%s275 + $0x78] sm:$0xff] %v411
        %v428 = vsub.f32 %v329, %v346
        %v429 = vsub.f32 %v330, %v347
        %v430 = vsub.f32 %v331, %v348
        %v431 = vsub.f32 %v332, %v349
        %v432 = vsub.f32 %v333, %v350
        %v433 = vsub.f32 %v334, %v351
        %v434 = vsub.f32 %v335, %v352
        %v435 = vsub.f32 %v336, %v353
        %v436 = vsub.f32 %v337, %v354
        %v437 = vsub.f32 %v338, %v355
        %v438 = vsub.f32 %v339, %v356
        %v439 = vsub.f32 %v340, %v357
        %v440 = vsub.f32 %v341, %v358
        %v441 = vsub.f32 %v342, %v359
        %v442 = vsub.f32 %v343, %v360
        %v443 = vsub.f32 %v344, %v361
        %444 = vst [vmem:[%s282] sm:$0xff] %v428
        %445 = vst [vmem:[%s282 + $0x8] sm:$0xff] %v429
        %446 = vst [vmem:[%s282 + $0x10] sm:$0xff] %v430
        %447 = vst [vmem:[%s282 + $0x18] sm:$0xff] %v431
        %448 = vst [vmem:[%s282 + $0x20] sm:$0xff] %v432
        %449 = vst [vmem:[%s282 + $0x28] sm:$0xff] %v433
        %450 = vst [vmem:[%s282 + $0x30] sm:$0xff] %v434
        %451 = vst [vmem:[%s282 + $0x38] sm:$0xff] %v435
        %452 = vst [vmem:[%s282 + $0x40] sm:$0xff] %v436
        %453 = vst [vmem:[%s282 + $0x48] sm:$0xff] %v437
        %454 = vst [vmem:[%s282 + $0x50] sm:$0xff] %v438
        %455 = vst [vmem:[%s282 + $0x58] sm:$0xff] %v439
        %456 = vst [vmem:[%s282 + $0x60] sm:$0xff] %v440
        %457 = vst [vmem:[%s282 + $0x68] sm:$0xff] %v441
        %458 = vst [vmem:[%s282 + $0x70] sm:$0xff] %v442
        %459 = vst [vmem:[%s282 + $0x78] sm:$0xff] %v443
        %v460 = vmul.f32 %v346, %v363
        %v461 = vmul.f32 %v347, %v364
        %v462 = vmul.f32 %v348, %v365
        %v463 = vmul.f32 %v349, %v366
        %v464 = vmul.f32 %v350, %v367
        %v465 = vmul.f32 %v351, %v368
        %v466 = vmul.f32 %v352, %v369
        %v467 = vmul.f32 %v353, %v370
        %v468 = vmul.f32 %v354, %v371
        %v469 = vmul.f32 %v355, %v372
        %v470 = vmul.f32 %v356, %v373
        %v471 = vmul.f32 %v357, %v374
        %v472 = vmul.f32 %v358, %v375
        %v473 = vmul.f32 %v359, %v376
        %v474 = vmul.f32 %v360, %v377
        %v475 = vmul.f32 %v361, %v378
        %476 = vst [vmem:[%s289] sm:$0xff] %v460
        %477 = vst [vmem:[%s289 + $0x8] sm:$0xff] %v461
        %478 = vst [vmem:[%s289 + $0x10] sm:$0xff] %v462
        %479 = vst [vmem:[%s289 + $0x18] sm:$0xff] %v463
        %480 = vst [vmem:[%s289 + $0x20] sm:$0xff] %v464
        %481 = vst [vmem:[%s289 + $0x28] sm:$0xff] %v465
        %482 = vst [vmem:[%s289 + $0x30] sm:$0xff] %v466
        %483 = vst [vmem:[%s289 + $0x38] sm:$0xff] %v467
        %484 = vst [vmem:[%s289 + $0x40] sm:$0xff] %v468
        %485 = vst [vmem:[%s289 + $0x48] sm:$0xff] %v469
        %486 = vst [vmem:[%s289 + $0x50] sm:$0xff] %v470
        %487 = vst [vmem:[%s289 + $0x58] sm:$0xff] %v471
        %488 = vst [vmem:[%s289 + $0x60] sm:$0xff] %v472
        %489 = vst [vmem:[%s289 + $0x68] sm:$0xff] %v473
        %490 = vst [vmem:[%s289 + $0x70] sm:$0xff] %v474
        %491 = vst [vmem:[%s289 + $0x78] sm:$0xff] %v475
        %v492 = vadd.f32 %v380, 1e-05
        %v493 = vadd.f32 %v381, 1e-05
        %v494 = vadd.f32 %v382, 1e-05
        %v495 = vadd.f32 %v383, 1e-05
        %v496 = vadd.f32 %v384, 1e-05
        %v497 = vadd.f32 %v385, 1e-05
        %v498 = vadd.f32 %v386, 1e-05
        %v499 = vadd.f32 %v387, 1e-05
        %v500 = vadd.f32 %v388, 1e-05
        %v501 = vadd.f32 %v389, 1e-05
        %v502 = vadd.f32 %v390, 1e-05
        %v503 = vadd.f32 %v391, 1e-05
        %v504 = vadd.f32 %v392, 1e-05
        %v505 = vadd.f32 %v393, 1e-05
        %v506 = vadd.f32 %v394, 1e-05
        %v507 = vadd.f32 %v395, 1e-05
        %v508 = vrcp.pop %v492
        %v509 = vmul.f32 %v363, %v508
        %v510 = vrcp.pop %v493
        %v511 = vmul.f32 %v364, %v510
        %v512 = vrcp.pop %v494
        %v513 = vmul.f32 %v365, %v512
        %v514 = vrcp.pop %v495
        %v515 = vmul.f32 %v366, %v514
        %v516 = vrcp.pop %v496
        %v517 = vmul.f32 %v367, %v516
        %v518 = vrcp.pop %v497
        %v519 = vmul.f32 %v368, %v518
        %v520 = vrcp.pop %v498
        %v521 = vmul.f32 %v369, %v520
        %v522 = vrcp.pop %v499
        %v523 = vmul.f32 %v370, %v522
        %v524 = vrcp.pop %v500
        %v525 = vmul.f32 %v371, %v524
        %v526 = vrcp.pop %v501
        %v527 = vmul.f32 %v372, %v526
        %v528 = vrcp.pop %v502
        %v529 = vmul.f32 %v373, %v528
        %v530 = vrcp.pop %v503
        %v531 = vmul.f32 %v374, %v530
        %v532 = vrcp.pop %v504
        %v533 = vmul.f32 %v375, %v532
        %v534 = vrcp.pop %v505
        %v535 = vmul.f32 %v376, %v534
        %v536 = vrcp.pop %v506
        %v537 = vmul.f32 %v377, %v536
        %v538 = vrcp.pop %v507
        %v539 = vmul.f32 %v378, %v538
        %540 = vst [vmem:[%s296] sm:$0xff] %v509
        %541 = vst [vmem:[%s296 + $0x8] sm:$0xff] %v511
        %542 = vst [vmem:[%s296 + $0x10] sm:$0xff] %v513
        %543 = vst [vmem:[%s296 + $0x18] sm:$0xff] %v515
        %544 = vst [vmem:[%s296 + $0x20] sm:$0xff] %v517
        %545 = vst [vmem:[%s296 + $0x28] sm:$0xff] %v519
        %546 = vst [vmem:[%s296 + $0x30] sm:$0xff] %v521
        %547 = vst [vmem:[%s296 + $0x38] sm:$0xff] %v523
        %548 = vst [vmem:[%s296 + $0x40] sm:$0xff] %v525
        %549 = vst [vmem:[%s296 + $0x48] sm:$0xff] %v527
        %550 = vst [vmem:[%s296 + $0x50] sm:$0xff] %v529
        %551 = vst [vmem:[%s296 + $0x58] sm:$0xff] %v531
        %552 = vst [vmem:[%s296 + $0x60] sm:$0xff] %v533
        %553 = vst [vmem:[%s296 + $0x68] sm:$0xff] %v535
        %554 = vst [vmem:[%s296 + $0x70] sm:$0xff] %v537
        %555 = vst [vmem:[%s296 + $0x78] sm:$0xff] %v539
        %vm556 = vcmp.gt.f32.partialorder %v312, %v380
        %vm557 = vcmp.gt.f32.partialorder %v313, %v381
        %vm558 = vcmp.gt.f32.partialorder %v314, %v382
        %vm559 = vcmp.gt.f32.partialorder %v315, %v383
        %vm560 = vcmp.gt.f32.partialorder %v316, %v384
        %vm561 = vcmp.gt.f32.partialorder %v317, %v385
        %vm562 = vcmp.gt.f32.partialorder %v318, %v386
        %vm563 = vcmp.gt.f32.partialorder %v319, %v387
        %vm564 = vcmp.gt.f32.partialorder %v320, %v388
        %vm565 = vcmp.gt.f32.partialorder %v321, %v389
        %vm566 = vcmp.gt.f32.partialorder %v322, %v390
        %vm567 = vcmp.gt.f32.partialorder %v323, %v391
        %vm568 = vcmp.gt.f32.partialorder %v324, %v392
        %vm569 = vcmp.gt.f32.partialorder %v325, %v393
        %vm570 = vcmp.gt.f32.partialorder %v326, %v394
        %vm571 = vcmp.gt.f32.partialorder %v327, %v395
        %vm572 = vmpackc.low %vm558, %vm556
        %vm573 = vmpackc.low %vm562, %vm560
        %vm574 = vmpackc.even %vm573, %vm572
        %vm575 = vmpackc.low %vm559, %vm557
        %vm576 = vmpackc.low %vm563, %vm561
        %vm577 = vmpackc.even %vm576, %vm575
        %vm578 = vmpackc.low %vm566, %vm564
        %vm579 = vmpackc.low %vm570, %vm568
        %vm580 = vmpackc.even %vm579, %vm578
        %vm581 = vmpackc.low %vm567, %vm565
        %vm582 = vmpackc.low %vm571, %vm569
        %vm583 = vmpackc.even %vm582, %vm581
        %v584 = vsel %vm574, 16843009, 0
        %v585 = vsel %vm577, 16843009, 0
        %v586 = vsel %vm580, 16843009, 0
        %v587 = vsel %vm583, 16843009, 0
        %588 = vst [vmem:[%s303] sm:$0xff] %v584
        %589 = vst [vmem:[%s303 + $0x8] sm:$0xff] %v585
        %590 = vst [vmem:[%s303 + $0x10] sm:$0xff] %v586
        %591 = vst [vmem:[%s303 + $0x18] sm:$0xff] %v587
        %s592 = sand.u32 %s63, 1
        %s593 = scalar_lea.sflag [#allocation4], %s592
        %s594 = sand.u32 %s63, 1
        %s595 = smul.addr %s594, 128
        %s596 = scalar_lea.vmem [#allocation5], %s595
        %s597 = sand.u32 %s29, 1
        %s598 = scalar_lea.sflag [#allocation7], %s597
        %s599 = sand.u32 %s89, 1
        %s600 = smul.addr %s599, 128
        %s601 = scalar_lea.vmem [#allocation6], %s600
        %s602 = sand.u32 %s29, 1
        %s603 = scalar_lea.sflag [#allocation7], %s602
        %s604 = sand.u32 %s115, 1
        %s605 = smul.addr %s604, 128
        %s606 = scalar_lea.vmem [#allocation8], %s605
        %s607 = sand.u32 %s29, 1
        %s608 = scalar_lea.sflag [#allocation10], %s607
        %s609 = sand.u32 %s141, 1
        %s610 = smul.addr %s609, 128
        %s611 = scalar_lea.vmem [#allocation9], %s610
        %s612 = sand.u32 %s29, 1
        %s613 = scalar_lea.sflag [#allocation10], %s612
        %s614 = sand.u32 %s167, 1
        %s615 = smul.addr %s614, 32
        %s616 = scalar_lea.vmem [#allocation11], %s615
        // Predicated region
        $region29: #{tpu_custom_call.1} parent=23 // pred_check
          %p617 = pneg %p73
        $region30: #{tpu_custom_call.1} parent=23 // pred_check_branch
          %619 = sbr.rel (%p617) target = $region32
        $region31: #{tpu_custom_call.1} parent=23 // pred_region
          %s620 = smul.u32 8, %s29
          %s622 = ssub.s32 2048, 2048
          %623 = vsyncadd %s593, %s622
          %s624 = smul.addr %s620, 2
          %s625 = smul.addr %s624, 128
          %s626 = scalar_lea.hbm %s1, %s625
          %s627 = sshll.u32 %s596, 4
          %s628 = int_to_ptr.vmem [resolvable:$true] %s627
          %633 = dma.vmem_to_hbm [thread:$0]  %s628, 2048, %s626, %s593, 256, 256, 16
        $region32: #{tpu_custom_call.1} parent=23 // pred_fallthru
          _
        // Predicated region
        $region33: #{tpu_custom_call.1} parent=23 // pred_check
          %p634 = pneg %p99
        $region34: #{tpu_custom_call.1} parent=23 // pred_check_branch
          %636 = sbr.rel (%p634) target = $region36
        $region35: #{tpu_custom_call.1} parent=23 // pred_region
          %s637 = smul.u32 8, %s29
          %s639 = ssub.s32 2048, 2048
          %640 = vsyncadd %s598, %s639
          %s641 = smul.addr %s637, 2
          %s642 = smul.addr %s641, 128
          %s643 = scalar_lea.hbm %s2, %s642
          %s644 = sshll.u32 %s601, 4
          %s645 = int_to_ptr.vmem [resolvable:$true] %s644
          %650 = dma.vmem_to_hbm [thread:$0]  %s645, 2048, %s643, %s598, 256, 256, 16
        $region36: #{tpu_custom_call.1} parent=23 // pred_fallthru
          _
        // Predicated region
        $region37: #{tpu_custom_call.1} parent=23 // pred_check
          %p651 = pneg %p125
        $region38: #{tpu_custom_call.1} parent=23 // pred_check_branch
          %653 = sbr.rel (%p651) target = $region40
        $region39: #{tpu_custom_call.1} parent=23 // pred_region
          %s654 = smul.u32 8, %s29
          %s656 = ssub.s32 2048, 2048
          %657 = vsyncadd %s603, %s656
          %s658 = smul.addr %s654, 2
          %s659 = smul.addr %s658, 128
          %s660 = scalar_lea.hbm %s3, %s659
          %s661 = sshll.u32 %s606, 4
          %s662 = int_to_ptr.vmem [resolvable:$true] %s661
          %667 = dma.vmem_to_hbm [thread:$0]  %s662, 2048, %s660, %s603, 256, 256, 16
        $region40: #{tpu_custom_call.1} parent=23 // pred_fallthru
          _
        // Predicated region
        $region41: #{tpu_custom_call.1} parent=23 // pred_check
          %p668 = pneg %p151
        $region42: #{tpu_custom_call.1} parent=23 // pred_check_branch
          %670 = sbr.rel (%p668) target = $region44
        $region43: #{tpu_custom_call.1} parent=23 // pred_region
          %s671 = smul.u32 8, %s29
          %s673 = ssub.s32 2048, 2048
          %674 = vsyncadd %s608, %s673
          %s675 = smul.addr %s671, 2
          %s676 = smul.addr %s675, 128
          %s677 = scalar_lea.hbm %s4, %s676
          %s678 = sshll.u32 %s611, 4
          %s679 = int_to_ptr.vmem [resolvable:$true] %s678
          %684 = dma.vmem_to_hbm [thread:$0]  %s679, 2048, %s677, %s608, 256, 256, 16
        $region44: #{tpu_custom_call.1} parent=23 // pred_fallthru
          _
        // Predicated region
        $region45: #{tpu_custom_call.1} parent=23 // pred_check
          %p685 = pneg %p177
        $region46: #{tpu_custom_call.1} parent=23 // pred_check_branch
          %687 = sbr.rel (%p685) target = $region48
        $region47: #{tpu_custom_call.1} parent=23 // pred_region
          %s688 = smul.u32 2, %s29
          %s690 = ssub.s32 512, 512
          %691 = vsyncadd %s613, %s690
          %s692 = smul.addr %s688, 2
          %s693 = smul.addr %s692, 128
          %s694 = scalar_lea.hbm %s5, %s693
          %s695 = sshll.u32 %s616, 4
          %s696 = int_to_ptr.vmem [resolvable:$true] %s695
          %701 = dma.vmem_to_hbm [thread:$0]  %s696, 512, %s694, %s613, 256, 256, 16
        $region48: #{tpu_custom_call.1} parent=23 // pred_fallthru
          _
      $region24: #{tpu_custom_call.1} parent=5 // pred_fallthru
        _
      %p702 = scmp.le.s32.totalorder 2, %s24
      // Predicated region
      $region49: #{tpu_custom_call.1} parent=5 // pred_check
        %p703 = pneg %p702
      $region50: #{tpu_custom_call.1} parent=5 // pred_check_branch
        %705 = sbr.rel (%p703) target = $region52
      $region51: #{tpu_custom_call.1} parent=5 // pred_region
        %s706 = ssub.s32 %s24, 2
        // Predicated region
        $region53: #{tpu_custom_call.1} parent=51 // pred_check
          %p707 = pneg %p79
        $region54: #{tpu_custom_call.1} parent=51 // pred_check_branch
          %709 = sbr.rel (%p707) target = $region56
        $region55: #{tpu_custom_call.1} parent=51 // pred_region
          %s710 = sand.u32 %s64, 1
          %s711 = scalar_lea.sflag [#allocation4], %s710
          %s712 = sand.u32 %s64, 1
          %s713 = smul.addr %s712, 128
          %s714 = scalar_lea.vmem [#allocation5], %s713
          %715 = dma.done %s711, 2048
        $region56: #{tpu_custom_call.1} parent=51 // pred_fallthru
          _
        // Predicated region
        $region57: #{tpu_custom_call.1} parent=51 // pred_check
          %p716 = pneg %p105
        $region58: #{tpu_custom_call.1} parent=51 // pred_check_branch
          %718 = sbr.rel (%p716) target = $region60
        $region59: #{tpu_custom_call.1} parent=51 // pred_region
          %s719 = sand.u32 %s30, 1
          %s720 = scalar_lea.sflag [#allocation7], %s719
          %s721 = sand.u32 %s90, 1
          %s722 = smul.addr %s721, 128
          %s723 = scalar_lea.vmem [#allocation6], %s722
          %724 = dma.done %s720, 2048
        $region60: #{tpu_custom_call.1} parent=51 // pred_fallthru
          _
        // Predicated region
        $region61: #{tpu_custom_call.1} parent=51 // pred_check
          %p725 = pneg %p131
        $region62: #{tpu_custom_call.1} parent=51 // pred_check_branch
          %727 = sbr.rel (%p725) target = $region64
        $region63: #{tpu_custom_call.1} parent=51 // pred_region
          %s728 = sand.u32 %s30, 1
          %s729 = scalar_lea.sflag [#allocation7], %s728
          %s730 = sand.u32 %s116, 1
          %s731 = smul.addr %s730, 128
          %s732 = scalar_lea.vmem [#allocation8], %s731
          %733 = dma.done %s729, 2048
        $region64: #{tpu_custom_call.1} parent=51 // pred_fallthru
          _
        // Predicated region
        $region65: #{tpu_custom_call.1} parent=51 // pred_check
          %p734 = pneg %p157
        $region66: #{tpu_custom_call.1} parent=51 // pred_check_branch
          %736 = sbr.rel (%p734) target = $region68
        $region67: #{tpu_custom_call.1} parent=51 // pred_region
          %s737 = sand.u32 %s30, 1
          %s738 = scalar_lea.sflag [#allocation10], %s737
          %s739 = sand.u32 %s142, 1
          %s740 = smul.addr %s739, 128
          %s741 = scalar_lea.vmem [#allocation9], %s740
          %742 = dma.done %s738, 2048
        $region68: #{tpu_custom_call.1} parent=51 // pred_fallthru
          _
        // Predicated region
        $region69: #{tpu_custom_call.1} parent=51 // pred_check
          %p743 = pneg %p183
        $region70: #{tpu_custom_call.1} parent=51 // pred_check_branch
          %745 = sbr.rel (%p743) target = $region72
        $region71: #{tpu_custom_call.1} parent=51 // pred_region
          %s746 = sand.u32 %s30, 1
          %s747 = scalar_lea.sflag [#allocation10], %s746
          %s748 = sand.u32 %s168, 1
          %s749 = smul.addr %s748, 32
          %s750 = scalar_lea.vmem [#allocation11], %s749
          %751 = dma.done %s747, 512
        $region72: #{tpu_custom_call.1} parent=51 // pred_fallthru
          _
      $region52: #{tpu_custom_call.1} parent=5 // pred_fallthru
        _
    $region6: #{tpu_custom_call.1} parent=1 // loop_footer
      %s28 = sadd.s32 1, %s24
    $region7: #{tpu_custom_call.1} parent=1 // loop_footer_branch
      %23 = sbr.rel target = $region3
    $region8: #{tpu_custom_call.1} parent=1 // loop_exit
      _
    %752 = vsyncpa [#allocation3], 1
    %s753 = scalar_lea.sflag [#allocation3], 1
    %754 = vsyncpa %s753, 1
    %755 = vsyncpa [#allocation4], 1
    %s756 = scalar_lea.sflag [#allocation4], 1
    %757 = vsyncpa %s756, 1
    %758 = vsyncpa [#allocation7], 1
    %s759 = scalar_lea.sflag [#allocation7], 1
    %760 = vsyncpa %s759, 1
    %761 = vsyncpa [#allocation10], 1
    %s762 = scalar_lea.sflag [#allocation10], 1
    %763 = vsyncpa %s762, 1

</llo_original>
